<compile_context>
chip_gen: v7x
topology: tpu7x:2x2x1
jax: 0.10.0
libtpu: 0.0.40
codegen_flags: <defaults>
</compile_context>

<pallas_src>
import jax
import jax.numpy as jnp
from jax.experimental import pallas as pl
from jax.experimental.pallas import tpu as pltpu

_TB_MAX = 4096  # cap on batch rows per grid step (keeps tiles within scoped VMEM on all gens)


def _round_up(x, m):
    return ((x + m - 1) // m) * m


def mlp_kernel(x_ref, w1_ref, b1_ref, w2_ref, b2_ref, w3_ref, b3_ref, o_ref):
    # In-kernel bf16 cast of the f32 input; all dots accumulate in f32 on the MXU.
    xb = x_ref[...].astype(jnp.bfloat16)

    # Layer 1: (TB, D)bf16 @ (D, 64)bf16 -> f32; bias + ReLU in f32.
    h1 = jnp.dot(xb, w1_ref[...], preferred_element_type=jnp.float32)
    h1 = jnp.maximum(h1 + b1_ref[...], 0.0)

    # Layer 2: (TB, 64) @ (64, 128) -> f32; bias + ReLU in f32.
    h2 = jnp.dot(h1.astype(jnp.bfloat16), w2_ref[...],
                 preferred_element_type=jnp.float32)
    h2 = jnp.maximum(h2 + b2_ref[...], 0.0)

    # Layer 3: (TB, 128) @ (128, C) -> f32; bias only, no activation.
    out = jnp.dot(h2.astype(jnp.bfloat16), w3_ref[...],
                  preferred_element_type=jnp.float32)
    o_ref[...] = (out + b3_ref[...]).astype(o_ref.dtype)


@jax.jit
def net_mtdt_forward(x, params):
    """x: (B, num_mtdt) float32.
    params: weights pre-transposed (in, out) in bf16, biases (1, out) in f32."""
    w1, b1 = params["w1"], params["b1"]
    w2, b2 = params["w2"], params["b2"]
    w3, b3 = params["w3"], params["b3"]

    B, D = x.shape
    C = w3.shape[1]

    # Balanced batch tile: split B into cdiv(B, _TB_MAX) roughly-equal tiles,
    # each rounded up to a multiple of 16 (bf16 sublane packing).  The last
    # (possibly partial) tile is handled by Pallas' built-in masking, so no
    # host-side padding of x or the output is needed.
    num_tiles = max(1, pl.cdiv(B, _TB_MAX))
    TB = _round_up(pl.cdiv(B, num_tiles), 16)
    grid = (pl.cdiv(B, TB),)

    const2 = lambda i: (0, 0)  # weights/biases: same block every step -> VMEM-resident

    out = pl.pallas_call(
        mlp_kernel,
        out_shape=jax.ShapeDtypeStruct((B, C), jnp.float32),
        grid=grid,
        in_specs=[
            pl.BlockSpec((TB, D), lambda i: (i, 0)),   # x: tiled over batch (f32)
            pl.BlockSpec(w1.shape, const2),            # w1 (D, 64)    bf16, resident
            pl.BlockSpec(b1.shape, const2),            # b1 (1, 64)    f32
            pl.BlockSpec(w2.shape, const2),            # w2 (64, 128)  bf16
            pl.BlockSpec(b2.shape, const2),            # b2 (1, 128)   f32
            pl.BlockSpec(w3.shape, const2),            # w3 (128, C)   bf16
            pl.BlockSpec(b3.shape, const2),            # b3 (1, C)     f32
        ],
        out_specs=pl.BlockSpec((TB, C), lambda i: (i, 0)),
        compiler_params=pltpu.CompilerParams(
            dimension_semantics=("parallel",),  # batch axis -> v7x megacore
        ),
    )(x, w1, b1, w2, b2, w3, b3)

    return out


def init_params(key, num_mtdt, n_classes):
    """PyTorch-Linear-style uniform init.

    Weights stored pre-transposed as (in, out) in bfloat16 (MXU operand dtype);
    biases stored as (1, out) in float32 (bias-add / ReLU run in f32)."""
    dims = [(num_mtdt, 64), (64, 128), (128, n_classes)]
    params = {}
    for i, (fan_in, fan_out) in enumerate(dims, start=1):
        key, kw, kb = jax.random.split(key, 3)
        bound = 1.0 / jnp.sqrt(jnp.float32(fan_in))
        params[f"w{i}"] = jax.random.uniform(
            kw, (fan_in, fan_out), jnp.float32, -bound, bound
        ).astype(jnp.bfloat16)
        params[f"b{i}"] = jax.random.uniform(
            kb, (1, fan_out), jnp.float32, -bound, bound
        )
    return params


def reference_forward(x, params):
    """Pure-JAX reference with the same bf16-operand / f32-accumulate numerics."""
    def layer(h, w, b):
        return jnp.dot(h.astype(jnp.bfloat16), w,
                       preferred_element_type=jnp.float32) + b

    h = jnp.maximum(layer(x, params["w1"], params["b1"]), 0.0)
    h = jnp.maximum(layer(h, params["w2"], params["b2"]), 0.0)
    return layer(h, params["w3"], params["b3"])


if __name__ == "__main__":
    B, num_mtdt, n_classes = 8, 16, 10

    key = jax.random.PRNGKey(0)
    key, kx = jax.random.split(key)
    x = jax.random.normal(kx, (B, num_mtdt), jnp.float32)
    params = init_params(key, num_mtdt, n_classes)

    out = jax.block_until_ready(net_mtdt_forward(x, params))
    ref = reference_forward(x, params)

    assert out.shape == (B, n_classes)
    assert jnp.allclose(out, ref, atol=1e-2, rtol=1e-2), float(
        jnp.max(jnp.abs(out - ref))
    )

    print("KERNEL_OK")
</pallas_src>

<mosaic_0001>
module attributes {stable_mosaic.version = 11 : i64} {
  func.func @mlp_kernel(%arg0: i32, %arg1: memref<16x16xf32, #tpu.memory_space<vmem>>, %arg2: memref<16x64xbf16, #tpu.memory_space<vmem>>, %arg3: memref<1x64xf32, #tpu.memory_space<vmem>>, %arg4: memref<64x128xbf16, #tpu.memory_space<vmem>>, %arg5: memref<1x128xf32, #tpu.memory_space<vmem>>, %arg6: memref<128x10xbf16, #tpu.memory_space<vmem>>, %arg7: memref<1x10xf32, #tpu.memory_space<vmem>>, %arg8: memref<16x10xf32, #tpu.memory_space<vmem>>) attributes {dimension_semantics = [#tpu.dimension_semantics<parallel>], iteration_bounds = array<i64: 1>, scalar_prefetch = 0 : i64, scratch_operands = 0 : i64, tpu.core_type = #tpu.core_type<tc>, window_params = [{transform_indices = @transform_0, window_bounds = array<i64: 16, 16>}, {pipeline_mode = #tpu.pipeline_mode<synchronous>, transform_indices = @transform_1, window_bounds = array<i64: 16, 64>}, {pipeline_mode = #tpu.pipeline_mode<synchronous>, transform_indices = @transform_2, window_bounds = array<i64: 1, 64>}, {pipeline_mode = #tpu.pipeline_mode<synchronous>, transform_indices = @transform_3, window_bounds = array<i64: 64, 128>}, {pipeline_mode = #tpu.pipeline_mode<synchronous>, transform_indices = @transform_4, window_bounds = array<i64: 1, 128>}, {pipeline_mode = #tpu.pipeline_mode<synchronous>, transform_indices = @transform_5, window_bounds = array<i64: 128, 10>}, {pipeline_mode = #tpu.pipeline_mode<synchronous>, transform_indices = @transform_6, window_bounds = array<i64: 1, 10>}, {transform_indices = @transform_7, window_bounds = array<i64: 16, 10>}]} {
    %c0 = arith.constant 0 : index
    %c0_0 = arith.constant 0 : index
    %0 = vector.load %arg1[%c0, %c0_0] : memref<16x16xf32, #tpu.memory_space<vmem>>, vector<16x16xf32>
    %1 = arith.truncf %0 : vector<16x16xf32> to vector<16x16xbf16>
    %c0_1 = arith.constant 0 : index
    %c0_2 = arith.constant 0 : index
    %2 = vector.load %arg2[%c0_1, %c0_2] : memref<16x64xbf16, #tpu.memory_space<vmem>>, vector<16x64xbf16>
    %cst = arith.constant dense<0.000000e+00> : vector<16x64xf32>
    %3 = tpu.matmul %1, %2, %cst {dimension_numbers = #tpu.dot_dimension_numbers<[1], [0], [0], [1], [0, 0, 1, 1], [], []>} : vector<16x16xbf16>, vector<16x64xbf16>, vector<16x64xf32> -> vector<16x64xf32>
    %c0_3 = arith.constant 0 : index
    %c0_4 = arith.constant 0 : index
    %4 = vector.load %arg3[%c0_3, %c0_4] : memref<1x64xf32, #tpu.memory_space<vmem>>, vector<1x64xf32>
    %5 = vector.broadcast %4 : vector<1x64xf32> to vector<16x64xf32>
    %6 = arith.addf %3, %5 : vector<16x64xf32>
    %cst_5 = arith.constant 0.000000e+00 : f32
    %7 = vector.broadcast %cst_5 : f32 to vector<16x64xf32>
    %8 = arith.maximumf %6, %7 : vector<16x64xf32>
    %9 = arith.truncf %8 : vector<16x64xf32> to vector<16x64xbf16>
    %c0_6 = arith.constant 0 : index
    %c0_7 = arith.constant 0 : index
    %10 = vector.load %arg4[%c0_6, %c0_7] : memref<64x128xbf16, #tpu.memory_space<vmem>>, vector<64x128xbf16>
    %cst_8 = arith.constant dense<0.000000e+00> : vector<16x128xf32>
    %11 = tpu.matmul %9, %10, %cst_8 {dimension_numbers = #tpu.dot_dimension_numbers<[1], [0], [0], [1], [0, 0, 1, 1], [], []>} : vector<16x64xbf16>, vector<64x128xbf16>, vector<16x128xf32> -> vector<16x128xf32>
    %c0_9 = arith.constant 0 : index
    %c0_10 = arith.constant 0 : index
    %12 = vector.load %arg5[%c0_9, %c0_10] : memref<1x128xf32, #tpu.memory_space<vmem>>, vector<1x128xf32>
    %13 = vector.broadcast %12 : vector<1x128xf32> to vector<16x128xf32>
    %14 = arith.addf %11, %13 : vector<16x128xf32>
    %cst_11 = arith.constant 0.000000e+00 : f32
    %15 = vector.broadcast %cst_11 : f32 to vector<16x128xf32>
    %16 = arith.maximumf %14, %15 : vector<16x128xf32>
    %17 = arith.truncf %16 : vector<16x128xf32> to vector<16x128xbf16>
    %c0_12 = arith.constant 0 : index
    %c0_13 = arith.constant 0 : index
    %18 = vector.load %arg6[%c0_12, %c0_13] : memref<128x10xbf16, #tpu.memory_space<vmem>>, vector<128x10xbf16>
    %cst_14 = arith.constant dense<0.000000e+00> : vector<16x10xf32>
    %19 = tpu.matmul %17, %18, %cst_14 {dimension_numbers = #tpu.dot_dimension_numbers<[1], [0], [0], [1], [0, 0, 1, 1], [], []>} : vector<16x128xbf16>, vector<128x10xbf16>, vector<16x10xf32> -> vector<16x10xf32>
    %c0_15 = arith.constant 0 : index
    %c0_16 = arith.constant 0 : index
    %20 = vector.load %arg7[%c0_15, %c0_16] : memref<1x10xf32, #tpu.memory_space<vmem>>, vector<1x10xf32>
    %21 = vector.broadcast %20 : vector<1x10xf32> to vector<16x10xf32>
    %22 = arith.addf %19, %21 : vector<16x10xf32>
    %c0_17 = arith.constant 0 : index
    %c0_18 = arith.constant 0 : index
    %23 = vector.load %arg8[%c0_17, %c0_18] : memref<16x10xf32, #tpu.memory_space<vmem>>, vector<16x10xf32>
    tpu.vector_store %arg8[%c0_17, %c0_18], %22 {strides = array<i32>} : memref<16x10xf32, #tpu.memory_space<vmem>>, vector<16x10xf32>,
    return
  }
  func.func @transform_0(%arg0: i32) -> (i32, i32) {
    %c0_i32 = arith.constant 0 : i32
    %c0_i32_0 = arith.constant 0 : i32
    return %arg0, %c0_i32 : i32, i32
  }
  func.func @transform_1(%arg0: i32) -> (i32, i32) {
    %c0_i32 = arith.constant 0 : i32
    %c0_i32_0 = arith.constant 0 : i32
    %c0_i32_1 = arith.constant 0 : i32
    return %c0_i32, %c0_i32_0 : i32, i32
  }
  func.func @transform_2(%arg0: i32) -> (i32, i32) {
    %c0_i32 = arith.constant 0 : i32
    %c0_i32_0 = arith.constant 0 : i32
    %c0_i32_1 = arith.constant 0 : i32
    return %c0_i32, %c0_i32_0 : i32, i32
  }
  func.func @transform_3(%arg0: i32) -> (i32, i32) {
    %c0_i32 = arith.constant 0 : i32
    %c0_i32_0 = arith.constant 0 : i32
    %c0_i32_1 = arith.constant 0 : i32
    return %c0_i32, %c0_i32_0 : i32, i32
  }
  func.func @transform_4(%arg0: i32) -> (i32, i32) {
    %c0_i32 = arith.constant 0 : i32
    %c0_i32_0 = arith.constant 0 : i32
    %c0_i32_1 = arith.constant 0 : i32
    return %c0_i32, %c0_i32_0 : i32, i32
  }
  func.func @transform_5(%arg0: i32) -> (i32, i32) {
    %c0_i32 = arith.constant 0 : i32
    %c0_i32_0 = arith.constant 0 : i32
    %c0_i32_1 = arith.constant 0 : i32
    return %c0_i32, %c0_i32_0 : i32, i32
  }
  func.func @transform_6(%arg0: i32) -> (i32, i32) {
    %c0_i32 = arith.constant 0 : i32
    %c0_i32_0 = arith.constant 0 : i32
    %c0_i32_1 = arith.constant 0 : i32
    return %c0_i32, %c0_i32_0 : i32, i32
  }
  func.func @transform_7(%arg0: i32) -> (i32, i32) {
    %c0_i32 = arith.constant 0 : i32
    %c0_i32_0 = arith.constant 0 : i32
    return %arg0, %c0_i32 : i32, i32
  }
}

</mosaic_0001>

<llo_original>
// kernel: net_mtdt_forward.1
$region0: #{net_mtdt_forward.1}
  #allocation0 [shape = 'u32[]', space=smem, size = 0x4, offset = 0x4, fixed_abs, tag = 'smem constant byte address 0x4 - core index']
  #allocation1 [shape = 'u32[144,128]{1,0:T(1,128)}', space=vmem, size = 0x12000, scoped, tag = 'internal scratch']
  %s0 = inlined_call_operand.vmem [shape: f32[8,16], index: 0, kind: input, shape index: {}]
  %s1 = inlined_call_operand.vmem [shape: bf16[16,64], index: 1, kind: input, shape index: {}]
  %s2 = inlined_call_operand.vmem [shape: f32[1,64], index: 2, kind: input, shape index: {}]
  %s3 = inlined_call_operand.vmem [shape: bf16[64,128], index: 3, kind: input, shape index: {}]
  %s4 = inlined_call_operand.vmem [shape: f32[1,128], index: 4, kind: input, shape index: {}]
  %s5 = inlined_call_operand.vmem [shape: bf16[128,10], index: 5, kind: input, shape index: {}]
  %s6 = inlined_call_operand.vmem [shape: f32[1,10], index: 6, kind: input, shape index: {}]
  %s7 = inlined_call_operand.hbm [shape: f32[8,10], index: 7, kind: output, shape index: {}]
  %s8 = sld [smem:[#allocation0]]
  $region38: #{net_mtdt_forward.1} parent=0
    _
  %s10 = ssub.s32 1, %s8
  %s11 = scalar_select 0, %s10, %s8
  $region1: #{net_mtdt_forward.1} parent=0
    #allocation2 [shape = 'u8[8192]{0}', space=vmem, size = 0x2000, scoped, tag = 'output window, operand 0, single buffered']
    #allocation3 [shape = 's32[1]{0}', space=sflag, size = 0x4, scoped, tag = 'scoped memory for net_mtdt_forward.1']
    %12 = vsyncpa [#allocation3], 0
    // Predicated region
    $region2: #{net_mtdt_forward.1} parent=1 // pred_check
      _
    $region3: #{net_mtdt_forward.1} parent=1 // pred_check_branch
      %14 = sbr.rel (0) target = $region5
    $region4: #{net_mtdt_forward.1} parent=1 // pred_region
      _
    $region5: #{net_mtdt_forward.1} parent=1 // pred_fallthru
      _
    // Predicated region
    $region6: #{net_mtdt_forward.1} parent=1 // pred_check
      _
    $region7: #{net_mtdt_forward.1} parent=1 // pred_check_branch
      %16 = sbr.rel (0) target = $region9
    $region8: #{net_mtdt_forward.1} parent=1 // pred_region
      _
    $region9: #{net_mtdt_forward.1} parent=1 // pred_fallthru
      _
    // Predicated region
    $region10: #{net_mtdt_forward.1} parent=1 // pred_check
      _
    $region11: #{net_mtdt_forward.1} parent=1 // pred_check_branch
      %18 = sbr.rel (0) target = $region13
    $region12: #{net_mtdt_forward.1} parent=1 // pred_region
      _
    $region13: #{net_mtdt_forward.1} parent=1 // pred_fallthru
      _
    // Predicated region
    $region14: #{net_mtdt_forward.1} parent=1 // pred_check
      _
    $region15: #{net_mtdt_forward.1} parent=1 // pred_check_branch
      %20 = sbr.rel (0) target = $region17
    $region16: #{net_mtdt_forward.1} parent=1 // pred_region
      _
    $region17: #{net_mtdt_forward.1} parent=1 // pred_fallthru
      _
    // Predicated region
    $region18: #{net_mtdt_forward.1} parent=1 // pred_check
      _
    $region19: #{net_mtdt_forward.1} parent=1 // pred_check_branch
      %22 = sbr.rel (0) target = $region21
    $region20: #{net_mtdt_forward.1} parent=1 // pred_region
      _
    $region21: #{net_mtdt_forward.1} parent=1 // pred_fallthru
      _
    // Predicated region
    $region22: #{net_mtdt_forward.1} parent=1 // pred_check
      _
    $region23: #{net_mtdt_forward.1} parent=1 // pred_check_branch
      %24 = sbr.rel (0) target = $region25
    $region24: #{net_mtdt_forward.1} parent=1 // pred_region
      _
    $region25: #{net_mtdt_forward.1} parent=1 // pred_fallthru
      _
    // Predicated region
    $region26: #{net_mtdt_forward.1} parent=1 // pred_check
      _
    $region27: #{net_mtdt_forward.1} parent=1 // pred_check_branch
      %26 = sbr.rel (0) target = $region29
    $region28: #{net_mtdt_forward.1} parent=1 // pred_region
      _
    $region29: #{net_mtdt_forward.1} parent=1 // pred_fallthru
      _
    %v28 = vld [vmem:[%s0] sm:$0xff]
    %v29 = vld [vmem:[%s0 + $0x8] sm:$0xff]
    %v30 = vpack.c.bf16 %v29, %v28
    %v31 = vld [vmem:[%s1] sm:$0xf]
    %v32 = vld [vmem:[%s1 + $0x4] sm:$0xf]
    %v33 = vld [vmem:[%s2] sm:$0x1]
    %v35 = vlaneseq
    %v36 = vshrl.u32 %v35, 7
    %v37 = vsub.s32 0, %v36
    %v38 = vrot.slane %v33, %v37
    %v42 = vunpack.c.l.b16 %v31
    %v43 = vunpack.c.l.b16 %v32
    %v44 = vpack.c.b16 %v43, %v42
    %vm46 = vcmask 130048
    %v48 = vsel %vm46, %v30, 0
    %50 = vmatprep.subr.bf16.mxu0 0
    %51 = vmatpush1.bf16.msra.mxu0 %v44
    %52 = vmatprep.subr.bf16.mxu0 0
    %53 = vmatpush1.bf16.msra.mxu0 0
    %54 = vmatprep.subr.bf16.mxu0 0
    %55 = vmatpush1.bf16.msra.mxu0 0
    %56 = vmatprep.subr.bf16.mxu0 0
    %57 = vmatpush1.bf16.msra.mxu0 0
    %58 = vmatprep.subr.bf16.mxu0 0
    %59 = vmatpush1.bf16.msra.mxu0 0
    %60 = vmatprep.subr.bf16.mxu0 0
    %61 = vmatpush1.bf16.msra.mxu0 0
    %62 = vmatprep.subr.bf16.mxu0 0
    %63 = vmatpush1.bf16.msra.mxu0 0
    %64 = vmatprep.subr.bf16.mxu0 0
    %65 = vmatpush1.bf16.msra.mxu0 0
    %66 = vmatprep.subr.bf16.mxu0 0
    %67 = vmatpush1.bf16.msra.mxu0 0
    %68 = vmatprep.subr.bf16.mxu0 0
    %69 = vmatpush1.bf16.msra.mxu0 0
    %70 = vmatprep.subr.bf16.mxu0 0
    %71 = vmatpush1.bf16.msra.mxu0 0
    %72 = vmatprep.subr.bf16.mxu0 0
    %73 = vmatpush1.bf16.msra.mxu0 0
    %74 = vmatprep.subr.bf16.mxu0 0
    %75 = vmatpush1.bf16.msra.mxu0 0
    %76 = vmatprep.subr.bf16.mxu0 0
    %77 = vmatpush1.bf16.msra.mxu0 0
    %78 = vmatprep.subr.bf16.mxu0 0
    %79 = vmatpush1.bf16.msra.mxu0 0
    %80 = vmatprep.subr.bf16.mxu0 0
    %81 = vmatpush1.bf16.msra.mxu0 0
    %82 = vmatprep.mubr.bf16.mxu0 0
    %83 = vmatmul.mubr.bf16.gmra.mrb[0].mxu0 %v48
    %v84 = vpop.f32.mrb[0].mxu0
    %v85 = vadd.f32 %v38, %v84
    %v86 = vpop.f32.mrb[0].mxu0
    %v87 = vpop.f32.mrb[0].mxu0
    %v88 = vadd.f32 %v38, %v87
    %v89 = vpop.f32.mrb[0].mxu0
    %90 = vdwg.mxu0
    %v91 = vmax.f32 %v85, 0.0
    %v92 = vmax.f32 %v88, 0.0
    %v93 = vpack.c.bf16 %v92, %v91
    %v94 = vld [vmem:[%s3] sm:$0xf]
    %v95 = vld [vmem:[%s3 + $0x4] sm:$0xf]
    %v96 = vld [vmem:[%s3 + $0x8] sm:$0xf]
    %v97 = vld [vmem:[%s3 + $0xc] sm:$0xf]
    %v98 = vld [vmem:[%s3 + $0x10] sm:$0xf]
    %v99 = vld [vmem:[%s3 + $0x14] sm:$0xf]
    %v100 = vld [vmem:[%s3 + $0x18] sm:$0xf]
    %v101 = vld [vmem:[%s3 + $0x1c] sm:$0xf]
    %v102 = vld [vmem:[%s4] sm:$0x1]
    %v104 = vlaneseq
    %v105 = vshrl.u32 %v104, 7
    %v106 = vsub.s32 0, %v105
    %v107 = vrot.slane %v102, %v106
    %v117 = vunpack.c.l.b16 %v94
    %v118 = vunpack.c.l.b16 %v95
    %v119 = vunpack.c.l.b16 %v96
    %v120 = vunpack.c.l.b16 %v97
    %v121 = vunpack.c.l.b16 %v98
    %v122 = vunpack.c.l.b16 %v99
    %v123 = vunpack.c.l.b16 %v100
    %v124 = vunpack.c.l.b16 %v101
    %v125 = vpack.c.b16 %v118, %v117
    %v126 = vpack.c.b16 %v120, %v119
    %v127 = vpack.c.b16 %v122, %v121
    %v128 = vpack.c.b16 %v124, %v123
    %vm133 = vcmask 523264
    %v135 = vsel %vm133, %v93, 0
    %137 = vmatprep.subr.bf16.mxu0 0
    %138 = vmatpush1.bf16.msra.mxu0 %v125
    %139 = vmatprep.subr.bf16.mxu0 0
    %140 = vmatpush1.bf16.msra.mxu0 %v126
    %141 = vmatprep.subr.bf16.mxu0 0
    %142 = vmatpush1.bf16.msra.mxu0 %v127
    %143 = vmatprep.subr.bf16.mxu0 0
    %144 = vmatpush1.bf16.msra.mxu0 %v128
    %145 = vmatprep.subr.bf16.mxu0 0
    %146 = vmatpush1.bf16.msra.mxu0 0
    %147 = vmatprep.subr.bf16.mxu0 0
    %148 = vmatpush1.bf16.msra.mxu0 0
    %149 = vmatprep.subr.bf16.mxu0 0
    %150 = vmatpush1.bf16.msra.mxu0 0
    %151 = vmatprep.subr.bf16.mxu0 0
    %152 = vmatpush1.bf16.msra.mxu0 0
    %153 = vmatprep.subr.bf16.mxu0 0
    %154 = vmatpush1.bf16.msra.mxu0 0
    %155 = vmatprep.subr.bf16.mxu0 0
    %156 = vmatpush1.bf16.msra.mxu0 0
    %157 = vmatprep.subr.bf16.mxu0 0
    %158 = vmatpush1.bf16.msra.mxu0 0
    %159 = vmatprep.subr.bf16.mxu0 0
    %160 = vmatpush1.bf16.msra.mxu0 0
    %161 = vmatprep.subr.bf16.mxu0 0
    %162 = vmatpush1.bf16.msra.mxu0 0
    %163 = vmatprep.subr.bf16.mxu0 0
    %164 = vmatpush1.bf16.msra.mxu0 0
    %165 = vmatprep.subr.bf16.mxu0 0
    %166 = vmatpush1.bf16.msra.mxu0 0
    %167 = vmatprep.subr.bf16.mxu0 0
    %168 = vmatpush1.bf16.msra.mxu0 0
    %169 = vmatprep.mubr.bf16.mxu0 0
    %170 = vmatmul.mubr.bf16.gmra.mrb[0].mxu0 %v135
    %v171 = vpop.f32.mrb[0].mxu0
    %v172 = vadd.f32 %v107, %v171
    %v173 = vpop.f32.mrb[0].mxu0
    %v174 = vpop.f32.mrb[0].mxu0
    %v175 = vadd.f32 %v107, %v174
    %v176 = vpop.f32.mrb[0].mxu0
    %177 = vdwg.mxu0
    %v178 = vmax.f32 %v172, 0.0
    %v179 = vmax.f32 %v175, 0.0
    %v180 = vpack.c.bf16 %v179, %v178
    %v181 = vld [vmem:[%s5] sm:$0xf]
    %v182 = vld [vmem:[%s5 + $0x4] sm:$0xf]
    %v183 = vld [vmem:[%s5 + $0x8] sm:$0xf]
    %v184 = vld [vmem:[%s5 + $0xc] sm:$0xf]
    %v185 = vld [vmem:[%s5 + $0x10] sm:$0xf]
    %v186 = vld [vmem:[%s5 + $0x14] sm:$0xf]
    %v187 = vld [vmem:[%s5 + $0x18] sm:$0xf]
    %v188 = vld [vmem:[%s5 + $0x1c] sm:$0xf]
    %v189 = vld [vmem:[%s5 + $0x20] sm:$0xf]
    %v190 = vld [vmem:[%s5 + $0x24] sm:$0xf]
    %v191 = vld [vmem:[%s5 + $0x28] sm:$0xf]
    %v192 = vld [vmem:[%s5 + $0x2c] sm:$0xf]
    %v193 = vld [vmem:[%s5 + $0x30] sm:$0xf]
    %v194 = vld [vmem:[%s5 + $0x34] sm:$0xf]
    %v195 = vld [vmem:[%s5 + $0x38] sm:$0xf]
    %v196 = vld [vmem:[%s5 + $0x3c] sm:$0xf]
    %v197 = vld [vmem:[%s6] sm:$0x1]
    %v199 = vlaneseq
    %v200 = vshrl.u32 %v199, 7
    %v201 = vsub.s32 0, %v200
    %v202 = vrot.slane %v197, %v201
    %v220 = vunpack.c.l.b16 %v181
    %v221 = vunpack.c.l.b16 %v182
    %v222 = vunpack.c.l.b16 %v183
    %v223 = vunpack.c.l.b16 %v184
    %v224 = vunpack.c.l.b16 %v185
    %v225 = vunpack.c.l.b16 %v186
    %v226 = vunpack.c.l.b16 %v187
    %v227 = vunpack.c.l.b16 %v188
    %v228 = vunpack.c.l.b16 %v189
    %v229 = vunpack.c.l.b16 %v190
    %v230 = vunpack.c.l.b16 %v191
    %v231 = vunpack.c.l.b16 %v192
    %v232 = vunpack.c.l.b16 %v193
    %v233 = vunpack.c.l.b16 %v194
    %v234 = vunpack.c.l.b16 %v195
    %v235 = vunpack.c.l.b16 %v196
    %v236 = vpack.c.b16 %v221, %v220
    %v237 = vpack.c.b16 %v223, %v222
    %v238 = vpack.c.b16 %v225, %v224
    %v239 = vpack.c.b16 %v227, %v226
    %v240 = vpack.c.b16 %v229, %v228
    %v241 = vpack.c.b16 %v231, %v230
    %v242 = vpack.c.b16 %v233, %v232
    %v243 = vpack.c.b16 %v235, %v234
    %252 = vmatprep.subr.bf16.mxu0 0
    %253 = vmatpush1.bf16.msra.mxu0 %v236
    %254 = vmatprep.subr.bf16.mxu0 0
    %255 = vmatpush1.bf16.msra.mxu0 %v237
    %256 = vmatprep.subr.bf16.mxu0 0
    %257 = vmatpush1.bf16.msra.mxu0 %v238
    %258 = vmatprep.subr.bf16.mxu0 0
    %259 = vmatpush1.bf16.msra.mxu0 %v239
    %260 = vmatprep.subr.bf16.mxu0 0
    %261 = vmatpush1.bf16.msra.mxu0 %v240
    %262 = vmatprep.subr.bf16.mxu0 0
    %263 = vmatpush1.bf16.msra.mxu0 %v241
    %264 = vmatprep.subr.bf16.mxu0 0
    %265 = vmatpush1.bf16.msra.mxu0 %v242
    %266 = vmatprep.subr.bf16.mxu0 0
    %267 = vmatpush1.bf16.msra.mxu0 %v243
    %268 = vmatprep.subr.bf16.mxu0 0
    %269 = vmatpush1.bf16.msra.mxu0 0
    %270 = vmatprep.subr.bf16.mxu0 0
    %271 = vmatpush1.bf16.msra.mxu0 0
    %272 = vmatprep.subr.bf16.mxu0 0
    %273 = vmatpush1.bf16.msra.mxu0 0
    %274 = vmatprep.subr.bf16.mxu0 0
    %275 = vmatpush1.bf16.msra.mxu0 0
    %276 = vmatprep.subr.bf16.mxu0 0
    %277 = vmatpush1.bf16.msra.mxu0 0
    %278 = vmatprep.subr.bf16.mxu0 0
    %279 = vmatpush1.bf16.msra.mxu0 0
    %280 = vmatprep.subr.bf16.mxu0 0
    %281 = vmatpush1.bf16.msra.mxu0 0
    %282 = vmatprep.subr.bf16.mxu0 0
    %283 = vmatpush1.bf16.msra.mxu0 0
    %284 = vmatprep.mubr.bf16.mxu0 0
    %285 = vmatmul.mubr.bf16.gmra.mrb[0].mxu0 %v180
    %v286 = vpop.f32.mrb[0].mxu0
    %v287 = vadd.f32 %v202, %v286
    %v288 = vpop.f32.mrb[0].mxu0
    %v289 = vpop.f32.mrb[0].mxu0
    %v290 = vadd.f32 %v202, %v289
    %v291 = vpop.f32.mrb[0].mxu0
    %292 = vdwg.mxu0
    %vm293 = vcmask 80896
    %294 = vst.msk [vmem:[#allocation2] sm:$0xff] %vm293, %v287
    %295 = vst.msk [vmem:[#allocation2 + $0x8] sm:$0xff] %vm293, %v290
    // Predicated region
    $region30: #{net_mtdt_forward.1} parent=1 // pred_check
      _
    $region31: #{net_mtdt_forward.1} parent=1 // pred_check_branch
      %297 = sbr.rel (0) target = $region33
    $region32: #{net_mtdt_forward.1} parent=1 // pred_region
      %s299 = ssub.s32 256, 128
      %300 = vsyncadd [#allocation3], %s299
      %s301 = sshll.u32 [#allocation2], 4
      %s302 = int_to_ptr.vmem [resolvable:$true] %s301
      %307 = dma.vmem_to_hbm [thread:$0]  %s302, 128, %s7, [#allocation3], 128, 128, 8
    $region33: #{net_mtdt_forward.1} parent=1 // pred_fallthru
      _
    // Predicated region
    $region34: #{net_mtdt_forward.1} parent=1 // pred_check
      _
    $region35: #{net_mtdt_forward.1} parent=1 // pred_check_branch
      %309 = sbr.rel (0) target = $region37
    $region36: #{net_mtdt_forward.1} parent=1 // pred_region
      %310 = dma.done [#allocation3], 256
    $region37: #{net_mtdt_forward.1} parent=1 // pred_fallthru
      _
    %311 = vsyncpa [#allocation3], 1

</llo_original>
